<compile_context>
chip_gen: v7x
topology: tpu7x:2x2x1
jax: 0.10.0
libtpu: 0.0.40
codegen_flags: <defaults>
</compile_context>

<pallas_src>
import jax
import jax.numpy as jnp
from jax.experimental import pallas as pl
from jax.experimental.pallas import tpu as pltpu

ACT_QMAX = 127.0   # symmetric int8, per-tensor
W_QMAX = 7.0       # symmetric 4-bit ("SD4"), per output channel


def _round_up(x, m):
    return (x + m - 1) // m * m


def _conv_bn_quant_kernel(inv_s_ref, x_ref, wq_ref, scale_ref, bias_ref, o_ref):
    # inv_s_ref : (1, 1)  f32 in SMEM   (1 / activation scale)
    # x_ref     : (tm, Cin_pad) f32     activations
    # wq_ref    : (Cin_pad, tn) bf16    weight on the integer grid (|q| <= 7)
    # scale_ref : (1, tn) f32           fused per-Cout scale
    # bias_ref  : (1, tn) f32           fused per-Cout bias
    # o_ref     : (tm, tn) f32
    inv_s = inv_s_ref[0, 0]
    # Snap activations to the int8 integer grid (no dequant here).
    q = jnp.clip(jnp.round(x_ref[...] * inv_s), -ACT_QMAX, ACT_QMAX)
    # Integer-grid matmul on the MXU (bf16 inputs are exact, f32 accumulate).
    acc = jnp.dot(q.astype(jnp.bfloat16), wq_ref[...],
                  preferred_element_type=jnp.float32)
    # Fused dequant + BN affine epilogue: one FMA per output element.
    o_ref[...] = acc * scale_ref[...] + bias_ref[...]


def dynamic_conv_bn_2d_quant(x, conv_weight, bn_gamma, bn_beta, bn_mean, bn_var,
                             *, out_channel=None, eps=1e-5, tm=256):
    """DynamicConvBn2dQuant.forward (eval path).

    x           : (N, Cin, H, W) float32, NCHW (PyTorch layout)
    conv_weight : (max_out, max_in, 1, 1) float32
    bn_*        : (max_out,) float32
    Returns (N, out_channel, H, W) float32.
    """
    N, Cin, H, W = x.shape
    if out_channel is None:
        out_channel = conv_weight.shape[0]
    Cout = int(out_channel)

    # ------------- tiny parameter-prep glue (plain JAX) -------------------
    w = conv_weight[:Cout, :Cin, 0, 0].astype(jnp.float32)          # (Cout, Cin)

    # per-tensor symmetric int8 activation scale (and its reciprocal, hoisted)
    s_act = jnp.max(jnp.abs(x)) / ACT_QMAX
    s_act = jnp.where(s_act > 0, s_act, 1.0).astype(jnp.float32)
    inv_s_act = (1.0 / s_act).reshape(1, 1).astype(jnp.float32)

    # per-output-channel symmetric 4-bit weight scale; keep weight on the
    # integer grid (dequant folded into the epilogue scale).
    s_w = jnp.max(jnp.abs(w), axis=1) / W_QMAX                      # (Cout,)
    s_w = jnp.where(s_w > 0, s_w, 1.0)
    wq = jnp.clip(jnp.round(w * (1.0 / s_w)[:, None]), -W_QMAX, W_QMAX)

    # fold act scale, weight scale and eval-mode BN affine into one FMA
    inv_std = jax.lax.rsqrt(bn_var[:Cout].astype(jnp.float32) + eps)
    g = bn_gamma[:Cout].astype(jnp.float32) * inv_std
    fused_scale = s_act * s_w * g                                   # (Cout,)
    fused_bias = (bn_beta[:Cout].astype(jnp.float32)
                  - g * bn_mean[:Cout].astype(jnp.float32))         # (Cout,)

    # ------------- layout: NCHW -> (M, Cin), lane-dense padding -----------
    M = N * H * W
    Cin_pad = _round_up(Cin, 128)
    Cout_pad = _round_up(Cout, 128)
    tm_eff = min(tm, _round_up(M, 8))
    M_pad = _round_up(M, tm_eff)
    tn = 256 if Cout_pad % 256 == 0 else 128

    x2 = jnp.transpose(x, (0, 2, 3, 1)).reshape(M, Cin)
    x2 = jnp.pad(x2, ((0, M_pad - M), (0, Cin_pad - Cin)))

    # (Cin_pad, Cout_pad); padded K rows are zero => reduction stays exact.
    wq_t = jnp.pad(wq.T, ((0, Cin_pad - Cin), (0, Cout_pad - Cout)))
    wq_t = wq_t.astype(jnp.bfloat16)    # |q| <= 7 is exact in bf16
    scale_row = jnp.pad(fused_scale, (0, Cout_pad - Cout)).reshape(1, Cout_pad)
    bias_row = jnp.pad(fused_bias, (0, Cout_pad - Cout)).reshape(1, Cout_pad)

    grid = (M_pad // tm_eff, Cout_pad // tn)

    out = pl.pallas_call(
        _conv_bn_quant_kernel,
        out_shape=jax.ShapeDtypeStruct((M_pad, Cout_pad), jnp.float32),
        grid=grid,
        in_specs=[
            pl.BlockSpec(memory_space=pltpu.MemorySpace.SMEM),          # inv_s_act
            pl.BlockSpec((tm_eff, Cin_pad), lambda i, j: (i, 0)),       # activations
            pl.BlockSpec((Cin_pad, tn), lambda i, j: (0, j)),           # resident weight
            pl.BlockSpec((1, tn), lambda i, j: (0, j)),                 # fused scale
            pl.BlockSpec((1, tn), lambda i, j: (0, j)),                 # fused bias
        ],
        out_specs=pl.BlockSpec((tm_eff, tn), lambda i, j: (i, j)),
        compiler_params=pltpu.CompilerParams(
            dimension_semantics=("parallel", "parallel")),
    )(inv_s_act, x2, wq_t, scale_row, bias_row)

    y = out[:M, :Cout].reshape(N, H, W, Cout)
    return jnp.transpose(y, (0, 3, 1, 2))


def _reference(x, conv_weight, gamma, beta, mean, var, eps, out_channel):
    """Pure-JAX reference of the same forward semantics (for verification)."""
    Cin = x.shape[1]
    w = conv_weight[:out_channel, :Cin, 0, 0].astype(jnp.float32)
    s_a = jnp.max(jnp.abs(x)) / ACT_QMAX
    s_a = jnp.where(s_a > 0, s_a, 1.0)
    xq = jnp.clip(jnp.round(x * (1.0 / s_a)), -ACT_QMAX, ACT_QMAX) * s_a
    s_w = jnp.max(jnp.abs(w), axis=1) / W_QMAX
    s_w = jnp.where(s_w > 0, s_w, 1.0)
    wq = jnp.clip(jnp.round(w * (1.0 / s_w)[:, None]), -W_QMAX, W_QMAX) * s_w[:, None]
    conv = jnp.einsum('nchw,oc->nohw', xq, wq,
                      precision=jax.lax.Precision.HIGHEST)
    inv_std = jax.lax.rsqrt(var[:out_channel] + eps)
    g = (gamma[:out_channel] * inv_std)[None, :, None, None]
    b = (beta[:out_channel]
         - gamma[:out_channel] * inv_std * mean[:out_channel])[None, :, None, None]
    return conv * g + b


if __name__ == "__main__":
    key = jax.random.PRNGKey(0)
    k1, k2, k3, k4, k5, k6 = jax.random.split(key, 6)

    # Small deterministic example consistent with the module's 1x1 conv.
    N, H, W_sp = 2, 16, 16
    max_in, max_out = 8, 16
    in_channel, out_channel = 4, 8      # "dynamic" active channel counts
    eps = 1e-5

    x = jax.random.normal(k1, (N, in_channel, H, W_sp), dtype=jnp.float32)
    conv_weight = 0.5 * jax.random.normal(k2, (max_out, max_in, 1, 1),
                                          dtype=jnp.float32)
    gamma = jax.random.uniform(k3, (max_out,), minval=0.5, maxval=1.5,
                               dtype=jnp.float32)
    beta = 0.1 * jax.random.normal(k4, (max_out,), dtype=jnp.float32)
    running_mean = 0.1 * jax.random.normal(k5, (max_out,), dtype=jnp.float32)
    running_var = jax.random.uniform(k6, (max_out,), minval=0.5, maxval=1.5,
                                     dtype=jnp.float32)

    y = dynamic_conv_bn_2d_quant(
        x, conv_weight, gamma, beta, running_mean, running_var,
        out_channel=out_channel, eps=eps)
    y = jax.block_until_ready(y)

    y_ref = jax.block_until_ready(
        _reference(x, conv_weight, gamma, beta, running_mean, running_var,
                   eps, out_channel))

    assert y.shape == (N, out_channel, H, W_sp), y.shape
    max_err = float(jnp.max(jnp.abs(y - y_ref)))
    assert jnp.allclose(y, y_ref, rtol=2e-3, atol=2e-3), max_err

    print("KERNEL_OK")
</pallas_src>

<mosaic_0001>
module attributes {stable_mosaic.version = 11 : i64} {
  func.func @_conv_bn_quant_kernel(%arg0: i32, %arg1: i32, %arg2: memref<1x1xf32, #tpu.memory_space<smem>>, %arg3: memref<256x128xf32, #tpu.memory_space<vmem>>, %arg4: memref<128x128xbf16, #tpu.memory_space<vmem>>, %arg5: memref<1x128xf32, #tpu.memory_space<vmem>>, %arg6: memref<1x128xf32, #tpu.memory_space<vmem>>, %arg7: memref<256x128xf32, #tpu.memory_space<vmem>>) attributes {dimension_semantics = [#tpu.dimension_semantics<parallel>, #tpu.dimension_semantics<parallel>], iteration_bounds = array<i64: 2, 1>, scalar_prefetch = 0 : i64, scratch_operands = 0 : i64, tpu.core_type = #tpu.core_type<tc>, window_params = [{transform_indices = @transform_0, window_bounds = array<i64: 1, 1>}, {transform_indices = @transform_1, window_bounds = array<i64: 256, 128>}, {transform_indices = @transform_2, window_bounds = array<i64: 128, 128>}, {transform_indices = @transform_3, window_bounds = array<i64: 1, 128>}, {transform_indices = @transform_4, window_bounds = array<i64: 1, 128>}, {transform_indices = @transform_5, window_bounds = array<i64: 256, 128>}]} {
    %c0 = arith.constant 0 : index
    %c0_0 = arith.constant 0 : index
    %0 = memref.load %arg2[%c0, %c0_0] : memref<1x1xf32, #tpu.memory_space<smem>>
    %c0_1 = arith.constant 0 : index
    %c0_2 = arith.constant 0 : index
    %1 = vector.load %arg3[%c0_1, %c0_2] : memref<256x128xf32, #tpu.memory_space<vmem>>, vector<256x128xf32>
    %2 = vector.broadcast %0 : f32 to vector<256x128xf32>
    %3 = arith.mulf %1, %2 : vector<256x128xf32>
    %4 = math.roundeven %3 : vector<256x128xf32>
    %cst = arith.constant -1.270000e+02 : f32
    %cst_3 = arith.constant 1.270000e+02 : f32
    %5 = vector.broadcast %cst : f32 to vector<256x128xf32>
    %6 = arith.maximumf %5, %4 : vector<256x128xf32>
    %7 = vector.broadcast %cst_3 : f32 to vector<256x128xf32>
    %8 = arith.minimumf %7, %6 : vector<256x128xf32>
    %9 = arith.truncf %8 : vector<256x128xf32> to vector<256x128xbf16>
    %c0_4 = arith.constant 0 : index
    %c0_5 = arith.constant 0 : index
    %10 = vector.load %arg4[%c0_4, %c0_5] : memref<128x128xbf16, #tpu.memory_space<vmem>>, vector<128x128xbf16>
    %cst_6 = arith.constant dense<0.000000e+00> : vector<256x128xf32>
    %11 = tpu.matmul %9, %10, %cst_6 {dimension_numbers = #tpu.dot_dimension_numbers<[1], [0], [0], [1], [0, 0, 1, 1], [], []>} : vector<256x128xbf16>, vector<128x128xbf16>, vector<256x128xf32> -> vector<256x128xf32>
    %c0_7 = arith.constant 0 : index
    %c0_8 = arith.constant 0 : index
    %12 = vector.load %arg5[%c0_7, %c0_8] : memref<1x128xf32, #tpu.memory_space<vmem>>, vector<1x128xf32>
    %13 = vector.broadcast %12 : vector<1x128xf32> to vector<256x128xf32>
    %14 = arith.mulf %11, %13 : vector<256x128xf32>
    %c0_9 = arith.constant 0 : index
    %c0_10 = arith.constant 0 : index
    %15 = vector.load %arg6[%c0_9, %c0_10] : memref<1x128xf32, #tpu.memory_space<vmem>>, vector<1x128xf32>
    %16 = vector.broadcast %15 : vector<1x128xf32> to vector<256x128xf32>
    %17 = arith.addf %14, %16 : vector<256x128xf32>
    %c0_11 = arith.constant 0 : index
    %c0_12 = arith.constant 0 : index
    %18 = vector.load %arg7[%c0_11, %c0_12] : memref<256x128xf32, #tpu.memory_space<vmem>>, vector<256x128xf32>
    tpu.vector_store %arg7[%c0_11, %c0_12], %17 {strides = array<i32>} : memref<256x128xf32, #tpu.memory_space<vmem>>, vector<256x128xf32>,
    return
  }
  func.func @transform_0(%arg0: i32, %arg1: i32) -> (i32, i32) {
    %c0_i32 = arith.constant 0 : i32
    %c0_i32_0 = arith.constant 0 : i32
    %c0_i32_1 = arith.constant 0 : i32
    return %c0_i32, %c0_i32_0 : i32, i32
  }
  func.func @transform_1(%arg0: i32, %arg1: i32) -> (i32, i32) {
    %c0_i32 = arith.constant 0 : i32
    %c0_i32_0 = arith.constant 0 : i32
    return %arg0, %c0_i32 : i32, i32
  }
  func.func @transform_2(%arg0: i32, %arg1: i32) -> (i32, i32) {
    %c0_i32 = arith.constant 0 : i32
    %c0_i32_0 = arith.constant 0 : i32
    return %c0_i32, %arg1 : i32, i32
  }
  func.func @transform_3(%arg0: i32, %arg1: i32) -> (i32, i32) {
    %c0_i32 = arith.constant 0 : i32
    %c0_i32_0 = arith.constant 0 : i32
    return %c0_i32, %arg1 : i32, i32
  }
  func.func @transform_4(%arg0: i32, %arg1: i32) -> (i32, i32) {
    %c0_i32 = arith.constant 0 : i32
    %c0_i32_0 = arith.constant 0 : i32
    return %c0_i32, %arg1 : i32, i32
  }
  func.func @transform_5(%arg0: i32, %arg1: i32) -> (i32, i32) {
    %c0_i32 = arith.constant 0 : i32
    return %arg0, %arg1 : i32, i32
  }
}

</mosaic_0001>

<llo_original>
// kernel: tpu_custom_call.1
$region0: #{tpu_custom_call.1}
  #allocation0 [shape = 'u32[]', space=smem, size = 0x4, offset = 0x4, fixed_abs, tag = 'smem constant byte address 0x4 - core index']
  #allocation1 [shape = 'u32[144,128]{1,0:T(1,128)}', space=vmem, size = 0x12000, scoped, tag = 'internal scratch']
  #allocation2 [shape = 'f32[1,1]{1,0:T(1,128)S(6)}', space=smem, size = 0x200, scoped, tag = 'scoped memory for tpu_custom_call.1']
  %s0 = inlined_call_operand.<no memory space> [shape: f32[1,1], index: 0, kind: input, shape index: {}]
  %s1 = inlined_call_operand.hbm [shape: f32[512,128], index: 1, kind: input, shape index: {}]
  %s2 = inlined_call_operand.hbm [shape: bf16[128,128], index: 2, kind: input, shape index: {}]
  %s3 = inlined_call_operand.vmem [shape: f32[1,128], index: 3, kind: input, shape index: {}]
  %s4 = inlined_call_operand.vmem [shape: f32[1,128], index: 4, kind: input, shape index: {}]
  %s5 = inlined_call_operand.hbm [shape: f32[512,128], index: 5, kind: output, shape index: {}]
  %s6 = sld [smem:[#allocation0]]
  $region61: #{tpu_custom_call.1} parent=0
    _
  %s8 = ssub.s32 1, %s6
  %s9 = scalar_select 0, %s8, %s6
  %10 = sst [smem:[#allocation2]] %s0
  $region1: #{tpu_custom_call.1} parent=0
    #allocation3 [shape = 'u8[262144]{0}', space=vmem, size = 0x40000, scoped, tag = 'input window, operand 1']
    #allocation4 [shape = 's32[2]{0}', space=sflag, size = 0x8, scoped, tag = 'scoped memory for tpu_custom_call.1']
    #allocation5 [shape = 's32[2]{0}', space=sflag, size = 0x8, scoped, tag = 'scoped memory for tpu_custom_call.1']
    #allocation6 [shape = 'u8[32768]{0}', space=vmem, size = 0x8000, scoped, tag = 'input window, operand 2, single buffered']
    #allocation7 [shape = 's32[1]{0}', space=sflag, size = 0x4, scoped, tag = 'scoped memory for tpu_custom_call.1']
    #allocation8 [shape = 'u8[262144]{0}', space=vmem, size = 0x40000, scoped, tag = 'output window, operand 0']
    %11 = vsyncpa [#allocation4], 0
    %s12 = scalar_lea.sflag [#allocation4], 1
    %13 = vsyncpa %s12, 0
    %14 = vsyncpa [#allocation7], 0
    %15 = vsyncpa [#allocation5], 0
    %s16 = scalar_lea.sflag [#allocation5], 1
    %17 = vsyncpa %s16, 0
    loop: start=0, step=1, limit=4
    $region2: #{tpu_custom_call.1} parent=1 // loop_pre_header
      _
    $region3: #{tpu_custom_call.1} parent=1 // loop_header
      %s19 = sphi 0, %s23
      %p20 = scmp.ge.s32.totalorder %s19, 4
      %s26 = sphi 0, %s38
      %s27 = sphi 0, %s34
      %s28 = sphi 0, %s26
      %s29 = sphi 0, %s27
      %s30 = sphi 0, %s28
      %s31 = sphi 0, %s29
      %s39 = sphi 0, %s39
      %s41 = sphi 0, %s39
      %s42 = sphi 0, %s41
      %s56 = sphi 0, %s42
      %s62 = sphi 0, %s64
      %s65 = sphi 0, %s62
      %s66 = sphi 0, %s65
      %s82 = sphi 0, %s66
      %s88 = sphi 0, %s90
      %s91 = sphi 0, %s88
      %s92 = sphi 0, %s91
      %s108 = sphi 0, %s92
      %s114 = sphi 0, %s116
      %s117 = sphi 0, %s114
      %s118 = sphi 0, %s117
      %s134 = sphi 0, %s118
      %s140 = sphi 0, %s142
      %s143 = sphi 0, %s140
      %s144 = sphi 0, %s143
      %s160 = sphi 0, %s144
      %s168 = sphi 0, %s170
      %s171 = sphi 0, %s168
      %s172 = sphi 0, %s171
      %s188 = sphi 0, %s172
    $region4: #{tpu_custom_call.1} parent=1 // loop_header_branch
      %22 = sbr.rel (%p20) target = $region8
    $region5: #{tpu_custom_call.1} parent=1 // loop_body
      %s24 = ssub.s32 %s19, 1
      %s25 = ssub.s32 %s19, 2
      %s32 = sadd.s32 1, %s27
      %p33 = scmp.ge.s32.totalorder %s32, 1
      %s34 = scalar_select %p33, 0, %s32
      %s35 = sadd.s32 1, %s26
      %s36 = scalar_select %p33, %s35, %s26
      %p37 = scmp.ge.s32.totalorder %s36, 2
      %s38 = scalar_select %p37, 0, %s36
      %s40 = sadd.s32 %s39, 1
      %p43 = scmp.eq.s32.totalorder %s19, 1
      %p44 = scmp.ne.s32.totalorder %s39, %s41
      %p45 = scmp.eq.s32.totalorder %s19, 0
      %p46 = por %p44, %p45
      %p47 = scmp.ne.s32.totalorder %s39, %s41
      %p48 = scmp.eq.s32.totalorder %s24, 1
      %p49 = por %p47, %p48
      %p50 = scmp.ne.s32.totalorder %s41, %s42
      %p51 = scmp.eq.s32.totalorder %s24, 0
      %p52 = por %p50, %p51
      %p53 = scmp.ne.s32.totalorder %s41, %s42
      %p54 = scmp.eq.s32.totalorder %s25, 1
      %p55 = por %p53, %p54
      %p57 = scmp.ne.s32.totalorder %s42, %s56
      %p58 = scmp.eq.s32.totalorder %s25, 0
      %p59 = por %p57, %p58
      %s60 = ssub.s32 %s26, %s38
      %p61 = scmp.eq.s32.totalorder %s60, 0
      %s63 = sadd.s32 %s62, 1
      %s64 = scalar_select %p61, %s62, %s63
      %p67 = pneg %p61
      %p68 = scmp.eq.s32.totalorder %s19, 1
      %p69 = por %p67, %p68
      %p70 = scmp.ne.s32.totalorder %s62, %s65
      %p71 = scmp.eq.s32.totalorder %s19, 0
      %p72 = por %p70, %p71
      %p73 = scmp.ne.s32.totalorder %s62, %s65
      %p74 = scmp.eq.s32.totalorder %s24, 1
      %p75 = por %p73, %p74
      %p76 = scmp.ne.s32.totalorder %s65, %s66
      %p77 = scmp.eq.s32.totalorder %s24, 0
      %p78 = por %p76, %p77
      %p79 = scmp.ne.s32.totalorder %s65, %s66
      %p80 = scmp.eq.s32.totalorder %s25, 1
      %p81 = por %p79, %p80
      %p83 = scmp.ne.s32.totalorder %s66, %s82
      %p84 = scmp.eq.s32.totalorder %s25, 0
      %p85 = por %p83, %p84
      %s86 = ssub.s32 %s27, %s34
      %p87 = scmp.eq.s32.totalorder %s86, 0
      %s89 = sadd.s32 %s88, 1
      %s90 = scalar_select %p87, %s88, %s89
      %p93 = pneg %p87
      %p94 = scmp.eq.s32.totalorder %s19, 1
      %p95 = por %p93, %p94
      %p96 = scmp.ne.s32.totalorder %s88, %s91
      %p97 = scmp.eq.s32.totalorder %s19, 0
      %p98 = por %p96, %p97
      %p99 = scmp.ne.s32.totalorder %s88, %s91
      %p100 = scmp.eq.s32.totalorder %s24, 1
      %p101 = por %p99, %p100
      %p102 = scmp.ne.s32.totalorder %s91, %s92
      %p103 = scmp.eq.s32.totalorder %s24, 0
      %p104 = por %p102, %p103
      %p105 = scmp.ne.s32.totalorder %s91, %s92
      %p106 = scmp.eq.s32.totalorder %s25, 1
      %p107 = por %p105, %p106
      %p109 = scmp.ne.s32.totalorder %s92, %s108
      %p110 = scmp.eq.s32.totalorder %s25, 0
      %p111 = por %p109, %p110
      %s112 = ssub.s32 %s27, %s34
      %p113 = scmp.eq.s32.totalorder %s112, 0
      %s115 = sadd.s32 %s114, 1
      %s116 = scalar_select %p113, %s114, %s115
      %p119 = pneg %p113
      %p120 = scmp.eq.s32.totalorder %s19, 1
      %p121 = por %p119, %p120
      %p122 = scmp.ne.s32.totalorder %s114, %s117
      %p123 = scmp.eq.s32.totalorder %s19, 0
      %p124 = por %p122, %p123
      %p125 = scmp.ne.s32.totalorder %s114, %s117
      %p126 = scmp.eq.s32.totalorder %s24, 1
      %p127 = por %p125, %p126
      %p128 = scmp.ne.s32.totalorder %s117, %s118
      %p129 = scmp.eq.s32.totalorder %s24, 0
      %p130 = por %p128, %p129
      %p131 = scmp.ne.s32.totalorder %s117, %s118
      %p132 = scmp.eq.s32.totalorder %s25, 1
      %p133 = por %p131, %p132
      %p135 = scmp.ne.s32.totalorder %s118, %s134
      %p136 = scmp.eq.s32.totalorder %s25, 0
      %p137 = por %p135, %p136
      %s138 = ssub.s32 %s27, %s34
      %p139 = scmp.eq.s32.totalorder %s138, 0
      %s141 = sadd.s32 %s140, 1
      %s142 = scalar_select %p139, %s140, %s141
      %p145 = pneg %p139
      %p146 = scmp.eq.s32.totalorder %s19, 1
      %p147 = por %p145, %p146
      %p148 = scmp.ne.s32.totalorder %s140, %s143
      %p149 = scmp.eq.s32.totalorder %s19, 0
      %p150 = por %p148, %p149
      %p151 = scmp.ne.s32.totalorder %s140, %s143
      %p152 = scmp.eq.s32.totalorder %s24, 1
      %p153 = por %p151, %p152
      %p154 = scmp.ne.s32.totalorder %s143, %s144
      %p155 = scmp.eq.s32.totalorder %s24, 0
      %p156 = por %p154, %p155
      %p157 = scmp.ne.s32.totalorder %s143, %s144
      %p158 = scmp.eq.s32.totalorder %s25, 1
      %p159 = por %p157, %p158
      %p161 = scmp.ne.s32.totalorder %s144, %s160
      %p162 = scmp.eq.s32.totalorder %s25, 0
      %p163 = por %p161, %p162
      %s164 = ssub.s32 %s26, %s38
      %s165 = ssub.s32 %s27, %s34
      %s166 = sor.u32 %s164, %s165
      %p167 = scmp.eq.s32.totalorder %s166, 0
      %s169 = sadd.s32 %s168, 1
      %s170 = scalar_select %p167, %s168, %s169
      %p173 = pneg %p167
      %p174 = scmp.eq.s32.totalorder %s19, 1
      %p175 = por %p173, %p174
      %p176 = scmp.ne.s32.totalorder %s168, %s171
      %p177 = scmp.eq.s32.totalorder %s19, 0
      %p178 = por %p176, %p177
      %p179 = scmp.ne.s32.totalorder %s168, %s171
      %p180 = scmp.eq.s32.totalorder %s24, 1
      %p181 = por %p179, %p180
      %p182 = scmp.ne.s32.totalorder %s171, %s172
      %p183 = scmp.eq.s32.totalorder %s24, 0
      %p184 = por %p182, %p183
      %p185 = scmp.ne.s32.totalorder %s171, %s172
      %p186 = scmp.eq.s32.totalorder %s25, 1
      %p187 = por %p185, %p186
      %p189 = scmp.ne.s32.totalorder %s172, %s188
      %p190 = scmp.eq.s32.totalorder %s25, 0
      %p191 = por %p189, %p190
      %p192 = scmp.le.s32.totalorder 1, %s19
      %p193 = scmp.lt.s32.totalorder %s19, 3
      %p194 = pnand %p192, %p193
      %p195 = pneg %p194
      // Predicated region
      $region9: #{tpu_custom_call.1} parent=5 // pred_check
        _
      $region10: #{tpu_custom_call.1} parent=5 // pred_check_branch
        %197 = sbr.rel (%p194) target = $region12
      $region11: #{tpu_custom_call.1} parent=5 // pred_region
        %s198 = ssub.s32 %s19, 1
        // Predicated region
        $region13: #{tpu_custom_call.1} parent=11 // pred_check
          %p199 = pneg %p52
        $region14: #{tpu_custom_call.1} parent=11 // pred_check_branch
          %201 = sbr.rel (%p199) target = $region16
        $region15: #{tpu_custom_call.1} parent=11 // pred_region
          _
        $region16: #{tpu_custom_call.1} parent=11 // pred_fallthru
          _
        // Predicated region
        $region17: #{tpu_custom_call.1} parent=11 // pred_check
          %p202 = pneg %p104
        $region18: #{tpu_custom_call.1} parent=11 // pred_check_branch
          %204 = sbr.rel (%p202) target = $region20
        $region19: #{tpu_custom_call.1} parent=11 // pred_region
          %s206 = ssub.s32 1024, 1024
          %207 = vsyncadd [#allocation7], %s206
          %s208 = smul.addr %s29, 64
          %s209 = scalar_lea.hbm %s2, %s208
          %s210 = sshll.u32 [#allocation6], 4
          %s211 = int_to_ptr.vmem [resolvable:$true] %s210
          %216 = dma.hbm_to_vmem [thread:$0]  %s209, 1024, %s211, [#allocation7], 64, 64, 4
        $region20: #{tpu_custom_call.1} parent=11 // pred_fallthru
          _
        // Predicated region
        $region21: #{tpu_custom_call.1} parent=11 // pred_check
          %p217 = pneg %p130
        $region22: #{tpu_custom_call.1} parent=11 // pred_check_branch
          %219 = sbr.rel (%p217) target = $region24
        $region23: #{tpu_custom_call.1} parent=11 // pred_region
          %p220 = scmp.lt.s32.totalorder %s29, 0
          %s221 = scalar_select %p220, %s29, 0
          %s222 = scalar_lea.vmem %s3, %s221
        $region24: #{tpu_custom_call.1} parent=11 // pred_fallthru
          _
        // Predicated region
        $region25: #{tpu_custom_call.1} parent=11 // pred_check
          %p223 = pneg %p156
        $region26: #{tpu_custom_call.1} parent=11 // pred_check_branch
          %225 = sbr.rel (%p223) target = $region28
        $region27: #{tpu_custom_call.1} parent=11 // pred_region
          %p226 = scmp.lt.s32.totalorder %s29, 0
          %s227 = scalar_select %p226, %s29, 0
          %s228 = scalar_lea.vmem %s4, %s227
        $region28: #{tpu_custom_call.1} parent=11 // pred_fallthru
          _
      $region12: #{tpu_custom_call.1} parent=5 // pred_fallthru
        _
      %p229 = scmp.lt.s32.totalorder %s19, 2
      // Predicated region
      $region29: #{tpu_custom_call.1} parent=5 // pred_check
        %p230 = pneg %p229
      $region30: #{tpu_custom_call.1} parent=5 // pred_check_branch
        %232 = sbr.rel (%p230) target = $region32
      $region31: #{tpu_custom_call.1} parent=5 // pred_region
        // Predicated region
        $region33: #{tpu_custom_call.1} parent=31 // pred_check
          %p233 = pneg %p72
        $region34: #{tpu_custom_call.1} parent=31 // pred_check_branch
          %235 = sbr.rel (%p233) target = $region36
        $region35: #{tpu_custom_call.1} parent=31 // pred_region
          %s236 = sand.u32 %s62, 1
          %s237 = scalar_lea.sflag [#allocation4], %s236
          %s238 = sand.u32 %s62, 1
          %s239 = smul.addr %s238, 256
          %s240 = scalar_lea.vmem [#allocation3], %s239
          %s241 = smul.u32 32, %s26
          %s243 = ssub.s32 4096, 4096
          %244 = vsyncadd %s237, %s243
          %s245 = smul.addr %s241, 128
          %s246 = scalar_lea.hbm %s1, %s245
          %s247 = sshll.u32 %s240, 4
          %s248 = int_to_ptr.vmem [resolvable:$true] %s247
          %253 = dma.hbm_to_vmem [thread:$0]  %s246, 4096, %s248, %s237, 128, 128, 8
        $region36: #{tpu_custom_call.1} parent=31 // pred_fallthru
          _
      $region32: #{tpu_custom_call.1} parent=5 // pred_fallthru
        _
      %p254 = scmp.le.s32.totalorder 1, %s19
      %p255 = scmp.lt.s32.totalorder %s19, 3
      %p256 = pnand %p254, %p255
      %p257 = pneg %p256
      // Predicated region
      $region37: #{tpu_custom_call.1} parent=5 // pred_check
        _
      $region38: #{tpu_custom_call.1} parent=5 // pred_check_branch
        %259 = sbr.rel (%p256) target = $region40
      $region39: #{tpu_custom_call.1} parent=5 // pred_region
        %s260 = ssub.s32 %s19, 1
        %s261 = sand.u32 %s65, 1
        %s262 = scalar_lea.sflag [#allocation4], %s261
        %s263 = sand.u32 %s65, 1
        %s264 = smul.addr %s263, 256
        %s265 = scalar_lea.vmem [#allocation3], %s264
        // Predicated region
        $region41: #{tpu_custom_call.1} parent=39 // pred_check
          %p266 = pneg %p78
        $region42: #{tpu_custom_call.1} parent=39 // pred_check_branch
          %268 = sbr.rel (%p266) target = $region44
        $region43: #{tpu_custom_call.1} parent=39 // pred_region
          %269 = dma.done %s262, 4096
        $region44: #{tpu_custom_call.1} parent=39 // pred_fallthru
          _
        // Predicated region
        $region45: #{tpu_custom_call.1} parent=39 // pred_check
          %p270 = pneg %p104
        $region46: #{tpu_custom_call.1} parent=39 // pred_check_branch
          %272 = sbr.rel (%p270) target = $region48
        $region47: #{tpu_custom_call.1} parent=39 // pred_region
          %273 = dma.done [#allocation7], 1024
        $region48: #{tpu_custom_call.1} parent=39 // pred_fallthru
          _
        %p274 = pneg %p52
        %p275 = pneg %p49
        %s276 = sand.u32 %s65, 1
        %s277 = scalar_lea.sflag [#allocation4], %s276
        %s278 = sand.u32 %s65, 1
        %s279 = smul.addr %s278, 256
        %s280 = scalar_lea.vmem [#allocation3], %s279
        %p281 = pneg %p78
        %p282 = pneg %p75
        %p283 = pneg %p104
        %p284 = pneg %p101
        %p285 = scmp.lt.s32.totalorder %s29, 0
        %s286 = scalar_select %p285, %s29, 0
        %s287 = scalar_lea.vmem %s3, %s286
        %p288 = pneg %p130
        %p289 = pneg %p127
        %p290 = scmp.lt.s32.totalorder %s29, 0
        %s291 = scalar_select %p290, %s29, 0
        %s292 = scalar_lea.vmem %s4, %s291
        %p293 = pneg %p156
        %p294 = pneg %p153
        %p295 = pneg %p184
        %p296 = pneg %p181
        %s297 = sand.u32 %s171, 1
        %s298 = scalar_lea.sflag [#allocation5], %s297
        %s299 = sand.u32 %s171, 1
        %s300 = smul.addr %s299, 256
        %s301 = scalar_lea.vmem [#allocation8], %s300
        %s302 = smul.u32 32, %s28
        %p303 = scmp.lt.s32.totalorder %s29, 0
        %s304 = scalar_select %p303, %s29, 0
        %s305 = scalar_lea.vmem %s3, %s304
        %p306 = scmp.lt.s32.totalorder %s29, 0
        %s307 = scalar_select %p306, %s29, 0
        %s308 = scalar_lea.vmem %s4, %s307
        %s309 = smul.u32 32, %s28
        %s311 = sld [smem:[#allocation2]]
        %v312 = vld [vmem:[%s265] sm:$0xff]
        %v313 = vld [vmem:[%s265 + $0x8] sm:$0xff]
        %v314 = vld [vmem:[%s265 + $0x10] sm:$0xff]
        %v315 = vld [vmem:[%s265 + $0x18] sm:$0xff]
        %v316 = vld [vmem:[%s265 + $0x20] sm:$0xff]
        %v317 = vld [vmem:[%s265 + $0x28] sm:$0xff]
        %v318 = vld [vmem:[%s265 + $0x30] sm:$0xff]
        %v319 = vld [vmem:[%s265 + $0x38] sm:$0xff]
        %v320 = vld [vmem:[%s265 + $0x40] sm:$0xff]
        %v321 = vld [vmem:[%s265 + $0x48] sm:$0xff]
        %v322 = vld [vmem:[%s265 + $0x50] sm:$0xff]
        %v323 = vld [vmem:[%s265 + $0x58] sm:$0xff]
        %v324 = vld [vmem:[%s265 + $0x60] sm:$0xff]
        %v325 = vld [vmem:[%s265 + $0x68] sm:$0xff]
        %v326 = vld [vmem:[%s265 + $0x70] sm:$0xff]
        %v327 = vld [vmem:[%s265 + $0x78] sm:$0xff]
        %v328 = vld [vmem:[%s265 + $0x80] sm:$0xff]
        %v329 = vld [vmem:[%s265 + $0x88] sm:$0xff]
        %v330 = vld [vmem:[%s265 + $0x90] sm:$0xff]
        %v331 = vld [vmem:[%s265 + $0x98] sm:$0xff]
        %v332 = vld [vmem:[%s265 + $0xa0] sm:$0xff]
        %v333 = vld [vmem:[%s265 + $0xa8] sm:$0xff]
        %v334 = vld [vmem:[%s265 + $0xb0] sm:$0xff]
        %v335 = vld [vmem:[%s265 + $0xb8] sm:$0xff]
        %v336 = vld [vmem:[%s265 + $0xc0] sm:$0xff]
        %v337 = vld [vmem:[%s265 + $0xc8] sm:$0xff]
        %v338 = vld [vmem:[%s265 + $0xd0] sm:$0xff]
        %v339 = vld [vmem:[%s265 + $0xd8] sm:$0xff]
        %v340 = vld [vmem:[%s265 + $0xe0] sm:$0xff]
        %v341 = vld [vmem:[%s265 + $0xe8] sm:$0xff]
        %v342 = vld [vmem:[%s265 + $0xf0] sm:$0xff]
        %v343 = vld [vmem:[%s265 + $0xf8] sm:$0xff]
        %v344 = vstv %s311
        %v345 = vmul.f32 %v312, %v344
        %v346 = vmul.f32 %v313, %v344
        %v347 = vmul.f32 %v314, %v344
        %v348 = vmul.f32 %v315, %v344
        %v349 = vmul.f32 %v316, %v344
        %v350 = vmul.f32 %v317, %v344
        %v351 = vmul.f32 %v318, %v344
        %v352 = vmul.f32 %v319, %v344
        %v353 = vmul.f32 %v320, %v344
        %v354 = vmul.f32 %v321, %v344
        %v355 = vmul.f32 %v322, %v344
        %v356 = vmul.f32 %v323, %v344
        %v357 = vmul.f32 %v324, %v344
        %v358 = vmul.f32 %v325, %v344
        %v359 = vmul.f32 %v326, %v344
        %v360 = vmul.f32 %v327, %v344
        %v361 = vmul.f32 %v328, %v344
        %v362 = vmul.f32 %v329, %v344
        %v363 = vmul.f32 %v330, %v344
        %v364 = vmul.f32 %v331, %v344
        %v365 = vmul.f32 %v332, %v344
        %v366 = vmul.f32 %v333, %v344
        %v367 = vmul.f32 %v334, %v344
        %v368 = vmul.f32 %v335, %v344
        %v369 = vmul.f32 %v336, %v344
        %v370 = vmul.f32 %v337, %v344
        %v371 = vmul.f32 %v338, %v344
        %v372 = vmul.f32 %v339, %v344
        %v373 = vmul.f32 %v340, %v344
        %v374 = vmul.f32 %v341, %v344
        %v375 = vmul.f32 %v342, %v344
        %v376 = vmul.f32 %v343, %v344
        %v377 = vround.ne.pseudo %v345
        %v378 = vround.ne.pseudo %v346
        %v379 = vround.ne.pseudo %v347
        %v380 = vround.ne.pseudo %v348
        %v381 = vround.ne.pseudo %v349
        %v382 = vround.ne.pseudo %v350
        %v383 = vround.ne.pseudo %v351
        %v384 = vround.ne.pseudo %v352
        %v385 = vround.ne.pseudo %v353
        %v386 = vround.ne.pseudo %v354
        %v387 = vround.ne.pseudo %v355
        %v388 = vround.ne.pseudo %v356
        %v389 = vround.ne.pseudo %v357
        %v390 = vround.ne.pseudo %v358
        %v391 = vround.ne.pseudo %v359
        %v392 = vround.ne.pseudo %v360
        %v393 = vround.ne.pseudo %v361
        %v394 = vround.ne.pseudo %v362
        %v395 = vround.ne.pseudo %v363
        %v396 = vround.ne.pseudo %v364
        %v397 = vround.ne.pseudo %v365
        %v398 = vround.ne.pseudo %v366
        %v399 = vround.ne.pseudo %v367
        %v400 = vround.ne.pseudo %v368
        %v401 = vround.ne.pseudo %v369
        %v402 = vround.ne.pseudo %v370
        %v403 = vround.ne.pseudo %v371
        %v404 = vround.ne.pseudo %v372
        %v405 = vround.ne.pseudo %v373
        %v406 = vround.ne.pseudo %v374
        %v407 = vround.ne.pseudo %v375
        %v408 = vround.ne.pseudo %v376
        %v409 = vmax.f32 %v377, -127.0
        %v410 = vmax.f32 %v378, -127.0
        %v411 = vmax.f32 %v379, -127.0
        %v412 = vmax.f32 %v380, -127.0
        %v413 = vmax.f32 %v381, -127.0
        %v414 = vmax.f32 %v382, -127.0
        %v415 = vmax.f32 %v383, -127.0
        %v416 = vmax.f32 %v384, -127.0
        %v417 = vmax.f32 %v385, -127.0
        %v418 = vmax.f32 %v386, -127.0
        %v419 = vmax.f32 %v387, -127.0
        %v420 = vmax.f32 %v388, -127.0
        %v421 = vmax.f32 %v389, -127.0
        %v422 = vmax.f32 %v390, -127.0
        %v423 = vmax.f32 %v391, -127.0
        %v424 = vmax.f32 %v392, -127.0
        %v425 = vmax.f32 %v393, -127.0
        %v426 = vmax.f32 %v394, -127.0
        %v427 = vmax.f32 %v395, -127.0
        %v428 = vmax.f32 %v396, -127.0
        %v429 = vmax.f32 %v397, -127.0
        %v430 = vmax.f32 %v398, -127.0
        %v431 = vmax.f32 %v399, -127.0
        %v432 = vmax.f32 %v400, -127.0
        %v433 = vmax.f32 %v401, -127.0
        %v434 = vmax.f32 %v402, -127.0
        %v435 = vmax.f32 %v403, -127.0
        %v436 = vmax.f32 %v404, -127.0
        %v437 = vmax.f32 %v405, -127.0
        %v438 = vmax.f32 %v406, -127.0
        %v439 = vmax.f32 %v407, -127.0
        %v440 = vmax.f32 %v408, -127.0
        %v441 = vmin.f32 %v409, 127.0
        %v442 = vmin.f32 %v410, 127.0
        %v443 = vmin.f32 %v411, 127.0
        %v444 = vmin.f32 %v412, 127.0
        %v445 = vmin.f32 %v413, 127.0
        %v446 = vmin.f32 %v414, 127.0
        %v447 = vmin.f32 %v415, 127.0
        %v448 = vmin.f32 %v416, 127.0
        %v449 = vmin.f32 %v417, 127.0
        %v450 = vmin.f32 %v418, 127.0
        %v451 = vmin.f32 %v419, 127.0
        %v452 = vmin.f32 %v420, 127.0
        %v453 = vmin.f32 %v421, 127.0
        %v454 = vmin.f32 %v422, 127.0
        %v455 = vmin.f32 %v423, 127.0
        %v456 = vmin.f32 %v424, 127.0
        %v457 = vmin.f32 %v425, 127.0
        %v458 = vmin.f32 %v426, 127.0
        %v459 = vmin.f32 %v427, 127.0
        %v460 = vmin.f32 %v428, 127.0
        %v461 = vmin.f32 %v429, 127.0
        %v462 = vmin.f32 %v430, 127.0
        %v463 = vmin.f32 %v431, 127.0
        %v464 = vmin.f32 %v432, 127.0
        %v465 = vmin.f32 %v433, 127.0
        %v466 = vmin.f32 %v434, 127.0
        %v467 = vmin.f32 %v435, 127.0
        %v468 = vmin.f32 %v436, 127.0
        %v469 = vmin.f32 %v437, 127.0
        %v470 = vmin.f32 %v438, 127.0
        %v471 = vmin.f32 %v439, 127.0
        %v472 = vmin.f32 %v440, 127.0
        %v473 = vpack.c.bf16 %v442, %v441
        %v474 = vpack.c.bf16 %v444, %v443
        %v475 = vpack.c.bf16 %v446, %v445
        %v476 = vpack.c.bf16 %v448, %v447
        %v477 = vpack.c.bf16 %v450, %v449
        %v478 = vpack.c.bf16 %v452, %v451
        %v479 = vpack.c.bf16 %v454, %v453
        %v480 = vpack.c.bf16 %v456, %v455
        %v481 = vpack.c.bf16 %v458, %v457
        %v482 = vpack.c.bf16 %v460, %v459
        %v483 = vpack.c.bf16 %v462, %v461
        %v484 = vpack.c.bf16 %v464, %v463
        %v485 = vpack.c.bf16 %v466, %v465
        %v486 = vpack.c.bf16 %v468, %v467
        %v487 = vpack.c.bf16 %v470, %v469
        %v488 = vpack.c.bf16 %v472, %v471
        %v489 = vld [vmem:[#allocation6] sm:$0xf]
        %v490 = vld [vmem:[#allocation6 + $0x4] sm:$0xf]
        %v491 = vld [vmem:[#allocation6 + $0x8] sm:$0xf]
        %v492 = vld [vmem:[#allocation6 + $0xc] sm:$0xf]
        %v493 = vld [vmem:[#allocation6 + $0x10] sm:$0xf]
        %v494 = vld [vmem:[#allocation6 + $0x14] sm:$0xf]
        %v495 = vld [vmem:[#allocation6 + $0x18] sm:$0xf]
        %v496 = vld [vmem:[#allocation6 + $0x1c] sm:$0xf]
        %v497 = vld [vmem:[#allocation6 + $0x20] sm:$0xf]
        %v498 = vld [vmem:[#allocation6 + $0x24] sm:$0xf]
        %v499 = vld [vmem:[#allocation6 + $0x28] sm:$0xf]
        %v500 = vld [vmem:[#allocation6 + $0x2c] sm:$0xf]
        %v501 = vld [vmem:[#allocation6 + $0x30] sm:$0xf]
        %v502 = vld [vmem:[#allocation6 + $0x34] sm:$0xf]
        %v503 = vld [vmem:[#allocation6 + $0x38] sm:$0xf]
        %v504 = vld [vmem:[#allocation6 + $0x3c] sm:$0xf]
        %v521 = vunpack.c.l.b16 %v489
        %v522 = vunpack.c.l.b16 %v490
        %v523 = vunpack.c.l.b16 %v491
        %v524 = vunpack.c.l.b16 %v492
        %v525 = vunpack.c.l.b16 %v493
        %v526 = vunpack.c.l.b16 %v494
        %v527 = vunpack.c.l.b16 %v495
        %v528 = vunpack.c.l.b16 %v496
        %v529 = vunpack.c.l.b16 %v497
        %v530 = vunpack.c.l.b16 %v498
        %v531 = vunpack.c.l.b16 %v499
        %v532 = vunpack.c.l.b16 %v500
        %v533 = vunpack.c.l.b16 %v501
        %v534 = vunpack.c.l.b16 %v502
        %v535 = vunpack.c.l.b16 %v503
        %v536 = vunpack.c.l.b16 %v504
        %v537 = vpack.c.b16 %v522, %v521
        %v538 = vpack.c.b16 %v524, %v523
        %v539 = vpack.c.b16 %v526, %v525
        %v540 = vpack.c.b16 %v528, %v527
        %v541 = vpack.c.b16 %v530, %v529
        %v542 = vpack.c.b16 %v532, %v531
        %v543 = vpack.c.b16 %v534, %v533
        %v544 = vpack.c.b16 %v536, %v535
        %553 = vmatprep.subr.bf16.mxu0 0
        %554 = vmatpush1.bf16.msra.mxu0 %v537
        %555 = vmatprep.subr.bf16.mxu0 0
        %556 = vmatpush1.bf16.msra.mxu0 %v538
        %557 = vmatprep.subr.bf16.mxu0 0
        %558 = vmatpush1.bf16.msra.mxu0 %v539
        %559 = vmatprep.subr.bf16.mxu0 0
        %560 = vmatpush1.bf16.msra.mxu0 %v540
        %561 = vmatprep.subr.bf16.mxu0 0
        %562 = vmatpush1.bf16.msra.mxu0 %v541
        %563 = vmatprep.subr.bf16.mxu0 0
        %564 = vmatpush1.bf16.msra.mxu0 %v542
        %565 = vmatprep.subr.bf16.mxu0 0
        %566 = vmatpush1.bf16.msra.mxu0 %v543
        %567 = vmatprep.subr.bf16.mxu0 0
        %568 = vmatpush1.bf16.msra.mxu0 %v544
        %569 = vmatprep.subr.bf16.mxu0 0
        %570 = vmatpush1.bf16.msra.mxu0 0
        %571 = vmatprep.subr.bf16.mxu0 0
        %572 = vmatpush1.bf16.msra.mxu0 0
        %573 = vmatprep.subr.bf16.mxu0 0
        %574 = vmatpush1.bf16.msra.mxu0 0
        %575 = vmatprep.subr.bf16.mxu0 0
        %576 = vmatpush1.bf16.msra.mxu0 0
        %577 = vmatprep.subr.bf16.mxu0 0
        %578 = vmatpush1.bf16.msra.mxu0 0
        %579 = vmatprep.subr.bf16.mxu0 0
        %580 = vmatpush1.bf16.msra.mxu0 0
        %581 = vmatprep.subr.bf16.mxu0 0
        %582 = vmatpush1.bf16.msra.mxu0 0
        %583 = vmatprep.subr.bf16.mxu0 0
        %584 = vmatpush1.bf16.msra.mxu0 0
        %585 = vmatprep.mubr.bf16.mxu0 0
        %586 = vmatmul.mubr.bf16.gmra.mrb[0].mxu0 %v473
        %v587 = vpop.f32.mrb[0].mxu0
        %v588 = vadd.f32 0.0, %v587
        %v589 = vpop.f32.mrb[0].mxu0
        %v590 = vpop.f32.mrb[0].mxu0
        %v591 = vadd.f32 0.0, %v590
        %v592 = vpop.f32.mrb[0].mxu0
        %593 = vmatprep.mubr.bf16.mxu0 0
        %594 = vmatmul.mubr.bf16.gmra.mrb[0].mxu0 %v474
        %v595 = vpop.f32.mrb[0].mxu0
        %v596 = vadd.f32 0.0, %v595
        %v597 = vpop.f32.mrb[0].mxu0
        %v598 = vpop.f32.mrb[0].mxu0
        %v599 = vadd.f32 0.0, %v598
        %v600 = vpop.f32.mrb[0].mxu0
        %601 = vmatprep.mubr.bf16.mxu0 0
        %602 = vmatmul.mubr.bf16.gmra.mrb[0].mxu0 %v475
        %v603 = vpop.f32.mrb[0].mxu0
        %v604 = vadd.f32 0.0, %v603
        %v605 = vpop.f32.mrb[0].mxu0
        %v606 = vpop.f32.mrb[0].mxu0
        %v607 = vadd.f32 0.0, %v606
        %v608 = vpop.f32.mrb[0].mxu0
        %609 = vmatprep.mubr.bf16.mxu0 0
        %610 = vmatmul.mubr.bf16.gmra.mrb[0].mxu0 %v476
        %v611 = vpop.f32.mrb[0].mxu0
        %v612 = vadd.f32 0.0, %v611
        %v613 = vpop.f32.mrb[0].mxu0
        %v614 = vpop.f32.mrb[0].mxu0
        %v615 = vadd.f32 0.0, %v614
        %v616 = vpop.f32.mrb[0].mxu0
        %617 = vmatprep.mubr.bf16.mxu0 0
        %618 = vmatmul.mubr.bf16.gmra.mrb[0].mxu0 %v477
        %v619 = vpop.f32.mrb[0].mxu0
        %v620 = vadd.f32 0.0, %v619
        %v621 = vpop.f32.mrb[0].mxu0
        %v622 = vpop.f32.mrb[0].mxu0
        %v623 = vadd.f32 0.0, %v622
        %v624 = vpop.f32.mrb[0].mxu0
        %625 = vmatprep.mubr.bf16.mxu0 0
        %626 = vmatmul.mubr.bf16.gmra.mrb[0].mxu0 %v478
        %v627 = vpop.f32.mrb[0].mxu0
        %v628 = vadd.f32 0.0, %v627
        %v629 = vpop.f32.mrb[0].mxu0
        %v630 = vpop.f32.mrb[0].mxu0
        %v631 = vadd.f32 0.0, %v630
        %v632 = vpop.f32.mrb[0].mxu0
        %633 = vmatprep.mubr.bf16.mxu0 0
        %634 = vmatmul.mubr.bf16.gmra.mrb[0].mxu0 %v479
        %v635 = vpop.f32.mrb[0].mxu0
        %v636 = vadd.f32 0.0, %v635
        %v637 = vpop.f32.mrb[0].mxu0
        %v638 = vpop.f32.mrb[0].mxu0
        %v639 = vadd.f32 0.0, %v638
        %v640 = vpop.f32.mrb[0].mxu0
        %641 = vmatprep.mubr.bf16.mxu0 0
        %642 = vmatmul.mubr.bf16.gmra.mrb[0].mxu0 %v480
        %v643 = vpop.f32.mrb[0].mxu0
        %v644 = vadd.f32 0.0, %v643
        %v645 = vpop.f32.mrb[0].mxu0
        %v646 = vpop.f32.mrb[0].mxu0
        %v647 = vadd.f32 0.0, %v646
        %v648 = vpop.f32.mrb[0].mxu0
        %649 = vmatprep.mubr.bf16.mxu0 0
        %650 = vmatmul.mubr.bf16.gmra.mrb[0].mxu0 %v481
        %v651 = vpop.f32.mrb[0].mxu0
        %v652 = vadd.f32 0.0, %v651
        %v653 = vpop.f32.mrb[0].mxu0
        %v654 = vpop.f32.mrb[0].mxu0
        %v655 = vadd.f32 0.0, %v654
        %v656 = vpop.f32.mrb[0].mxu0
        %657 = vmatprep.mubr.bf16.mxu0 0
        %658 = vmatmul.mubr.bf16.gmra.mrb[0].mxu0 %v482
        %v659 = vpop.f32.mrb[0].mxu0
        %v660 = vadd.f32 0.0, %v659
        %v661 = vpop.f32.mrb[0].mxu0
        %v662 = vpop.f32.mrb[0].mxu0
        %v663 = vadd.f32 0.0, %v662
        %v664 = vpop.f32.mrb[0].mxu0
        %665 = vmatprep.mubr.bf16.mxu0 0
        %666 = vmatmul.mubr.bf16.gmra.mrb[0].mxu0 %v483
        %v667 = vpop.f32.mrb[0].mxu0
        %v668 = vadd.f32 0.0, %v667
        %v669 = vpop.f32.mrb[0].mxu0
        %v670 = vpop.f32.mrb[0].mxu0
        %v671 = vadd.f32 0.0, %v670
        %v672 = vpop.f32.mrb[0].mxu0
        %673 = vmatprep.mubr.bf16.mxu0 0
        %674 = vmatmul.mubr.bf16.gmra.mrb[0].mxu0 %v484
        %v675 = vpop.f32.mrb[0].mxu0
        %v676 = vadd.f32 0.0, %v675
        %v677 = vpop.f32.mrb[0].mxu0
        %v678 = vpop.f32.mrb[0].mxu0
        %v679 = vadd.f32 0.0, %v678
        %v680 = vpop.f32.mrb[0].mxu0
        %681 = vmatprep.mubr.bf16.mxu0 0
        %682 = vmatmul.mubr.bf16.gmra.mrb[0].mxu0 %v485
        %v683 = vpop.f32.mrb[0].mxu0
        %v684 = vadd.f32 0.0, %v683
        %v685 = vpop.f32.mrb[0].mxu0
        %v686 = vpop.f32.mrb[0].mxu0
        %v687 = vadd.f32 0.0, %v686
        %v688 = vpop.f32.mrb[0].mxu0
        %689 = vmatprep.mubr.bf16.mxu0 0
        %690 = vmatmul.mubr.bf16.gmra.mrb[0].mxu0 %v486
        %v691 = vpop.f32.mrb[0].mxu0
        %v692 = vadd.f32 0.0, %v691
        %v693 = vpop.f32.mrb[0].mxu0
        %v694 = vpop.f32.mrb[0].mxu0
        %v695 = vadd.f32 0.0, %v694
        %v696 = vpop.f32.mrb[0].mxu0
        %697 = vmatprep.mubr.bf16.mxu0 0
        %698 = vmatmul.mubr.bf16.gmra.mrb[0].mxu0 %v487
        %v699 = vpop.f32.mrb[0].mxu0
        %v700 = vadd.f32 0.0, %v699
        %v701 = vpop.f32.mrb[0].mxu0
        %v702 = vpop.f32.mrb[0].mxu0
        %v703 = vadd.f32 0.0, %v702
        %v704 = vpop.f32.mrb[0].mxu0
        %705 = vmatprep.mubr.bf16.mxu0 0
        %706 = vmatmul.mubr.bf16.gmra.mrb[0].mxu0 %v488
        %v707 = vpop.f32.mrb[0].mxu0
        %v708 = vadd.f32 0.0, %v707
        %v709 = vpop.f32.mrb[0].mxu0
        %v710 = vpop.f32.mrb[0].mxu0
        %v711 = vadd.f32 0.0, %v710
        %v712 = vpop.f32.mrb[0].mxu0
        %713 = vdwg.mxu0
        %v714 = vld [vmem:[%s305] sm:$0x1]
        %v716 = vlaneseq
        %v717 = vshrl.u32 %v716, 7
        %v718 = vsub.s32 0, %v717
        %v719 = vrot.slane %v714, %v718
        %v721 = vmul.f32 %v588, %v719
        %v722 = vmul.f32 %v591, %v719
        %v723 = vmul.f32 %v596, %v719
        %v724 = vmul.f32 %v599, %v719
        %v725 = vmul.f32 %v604, %v719
        %v726 = vmul.f32 %v607, %v719
        %v727 = vmul.f32 %v612, %v719
        %v728 = vmul.f32 %v615, %v719
        %v729 = vmul.f32 %v620, %v719
        %v730 = vmul.f32 %v623, %v719
        %v731 = vmul.f32 %v628, %v719
        %v732 = vmul.f32 %v631, %v719
        %v733 = vmul.f32 %v636, %v719
        %v734 = vmul.f32 %v639, %v719
        %v735 = vmul.f32 %v644, %v719
        %v736 = vmul.f32 %v647, %v719
        %v737 = vmul.f32 %v652, %v719
        %v738 = vmul.f32 %v655, %v719
        %v739 = vmul.f32 %v660, %v719
        %v740 = vmul.f32 %v663, %v719
        %v741 = vmul.f32 %v668, %v719
        %v742 = vmul.f32 %v671, %v719
        %v743 = vmul.f32 %v676, %v719
        %v744 = vmul.f32 %v679, %v719
        %v745 = vmul.f32 %v684, %v719
        %v746 = vmul.f32 %v687, %v719
        %v747 = vmul.f32 %v692, %v719
        %v748 = vmul.f32 %v695, %v719
        %v749 = vmul.f32 %v700, %v719
        %v750 = vmul.f32 %v703, %v719
        %v751 = vmul.f32 %v708, %v719
        %v752 = vmul.f32 %v711, %v719
        %v753 = vld [vmem:[%s308] sm:$0x1]
        %v755 = vlaneseq
        %v756 = vshrl.u32 %v755, 7
        %v757 = vsub.s32 0, %v756
        %v758 = vrot.slane %v753, %v757
        %v760 = vadd.f32 %v721, %v758
        %v761 = vadd.f32 %v722, %v758
        %v762 = vadd.f32 %v723, %v758
        %v763 = vadd.f32 %v724, %v758
        %v764 = vadd.f32 %v725, %v758
        %v765 = vadd.f32 %v726, %v758
        %v766 = vadd.f32 %v727, %v758
        %v767 = vadd.f32 %v728, %v758
        %v768 = vadd.f32 %v729, %v758
        %v769 = vadd.f32 %v730, %v758
        %v770 = vadd.f32 %v731, %v758
        %v771 = vadd.f32 %v732, %v758
        %v772 = vadd.f32 %v733, %v758
        %v773 = vadd.f32 %v734, %v758
        %v774 = vadd.f32 %v735, %v758
        %v775 = vadd.f32 %v736, %v758
        %v776 = vadd.f32 %v737, %v758
        %v777 = vadd.f32 %v738, %v758
        %v778 = vadd.f32 %v739, %v758
        %v779 = vadd.f32 %v740, %v758
        %v780 = vadd.f32 %v741, %v758
        %v781 = vadd.f32 %v742, %v758
        %v782 = vadd.f32 %v743, %v758
        %v783 = vadd.f32 %v744, %v758
        %v784 = vadd.f32 %v745, %v758
        %v785 = vadd.f32 %v746, %v758
        %v786 = vadd.f32 %v747, %v758
        %v787 = vadd.f32 %v748, %v758
        %v788 = vadd.f32 %v749, %v758
        %v789 = vadd.f32 %v750, %v758
        %v790 = vadd.f32 %v751, %v758
        %v791 = vadd.f32 %v752, %v758
        %792 = vst [vmem:[%s301] sm:$0xff] %v760
        %793 = vst [vmem:[%s301 + $0x8] sm:$0xff] %v761
        %794 = vst [vmem:[%s301 + $0x10] sm:$0xff] %v762
        %795 = vst [vmem:[%s301 + $0x18] sm:$0xff] %v763
        %796 = vst [vmem:[%s301 + $0x20] sm:$0xff] %v764
        %797 = vst [vmem:[%s301 + $0x28] sm:$0xff] %v765
        %798 = vst [vmem:[%s301 + $0x30] sm:$0xff] %v766
        %799 = vst [vmem:[%s301 + $0x38] sm:$0xff] %v767
        %800 = vst [vmem:[%s301 + $0x40] sm:$0xff] %v768
        %801 = vst [vmem:[%s301 + $0x48] sm:$0xff] %v769
        %802 = vst [vmem:[%s301 + $0x50] sm:$0xff] %v770
        %803 = vst [vmem:[%s301 + $0x58] sm:$0xff] %v771
        %804 = vst [vmem:[%s301 + $0x60] sm:$0xff] %v772
        %805 = vst [vmem:[%s301 + $0x68] sm:$0xff] %v773
        %806 = vst [vmem:[%s301 + $0x70] sm:$0xff] %v774
        %807 = vst [vmem:[%s301 + $0x78] sm:$0xff] %v775
        %808 = vst [vmem:[%s301 + $0x80] sm:$0xff] %v776
        %809 = vst [vmem:[%s301 + $0x88] sm:$0xff] %v777
        %810 = vst [vmem:[%s301 + $0x90] sm:$0xff] %v778
        %811 = vst [vmem:[%s301 + $0x98] sm:$0xff] %v779
        %812 = vst [vmem:[%s301 + $0xa0] sm:$0xff] %v780
        %813 = vst [vmem:[%s301 + $0xa8] sm:$0xff] %v781
        %814 = vst [vmem:[%s301 + $0xb0] sm:$0xff] %v782
        %815 = vst [vmem:[%s301 + $0xb8] sm:$0xff] %v783
        %816 = vst [vmem:[%s301 + $0xc0] sm:$0xff] %v784
        %817 = vst [vmem:[%s301 + $0xc8] sm:$0xff] %v785
        %818 = vst [vmem:[%s301 + $0xd0] sm:$0xff] %v786
        %819 = vst [vmem:[%s301 + $0xd8] sm:$0xff] %v787
        %820 = vst [vmem:[%s301 + $0xe0] sm:$0xff] %v788
        %821 = vst [vmem:[%s301 + $0xe8] sm:$0xff] %v789
        %822 = vst [vmem:[%s301 + $0xf0] sm:$0xff] %v790
        %823 = vst [vmem:[%s301 + $0xf8] sm:$0xff] %v791
        %s824 = sand.u32 %s171, 1
        %s825 = scalar_lea.sflag [#allocation5], %s824
        %s826 = sand.u32 %s171, 1
        %s827 = smul.addr %s826, 256
        %s828 = scalar_lea.vmem [#allocation8], %s827
        // Predicated region
        $region49: #{tpu_custom_call.1} parent=39 // pred_check
          %p829 = pneg %p181
        $region50: #{tpu_custom_call.1} parent=39 // pred_check_branch
          %831 = sbr.rel (%p829) target = $region52
        $region51: #{tpu_custom_call.1} parent=39 // pred_region
          %s832 = smul.u32 32, %s28
          %s834 = ssub.s32 4096, 4096
          %835 = vsyncadd %s825, %s834
          %s836 = sadd.s32 %s29, %s832
          %s837 = smul.addr %s836, 128
          %s838 = scalar_lea.hbm %s5, %s837
          %s839 = sshll.u32 %s828, 4
          %s840 = int_to_ptr.vmem [resolvable:$true] %s839
          %845 = dma.vmem_to_hbm [thread:$0]  %s840, 4096, %s838, %s825, 128, 128, 8
        $region52: #{tpu_custom_call.1} parent=39 // pred_fallthru
          _
      $region40: #{tpu_custom_call.1} parent=5 // pred_fallthru
        _
      %p846 = scmp.le.s32.totalorder 2, %s19
      // Predicated region
      $region53: #{tpu_custom_call.1} parent=5 // pred_check
        %p847 = pneg %p846
      $region54: #{tpu_custom_call.1} parent=5 // pred_check_branch
        %849 = sbr.rel (%p847) target = $region56
      $region55: #{tpu_custom_call.1} parent=5 // pred_region
        %s850 = ssub.s32 %s19, 2
        // Predicated region
        $region57: #{tpu_custom_call.1} parent=55 // pred_check
          %p851 = pneg %p187
        $region58: #{tpu_custom_call.1} parent=55 // pred_check_branch
          %853 = sbr.rel (%p851) target = $region60
        $region59: #{tpu_custom_call.1} parent=55 // pred_region
          %s854 = sand.u32 %s172, 1
          %s855 = scalar_lea.sflag [#allocation5], %s854
          %s856 = sand.u32 %s172, 1
          %s857 = smul.addr %s856, 256
          %s858 = scalar_lea.vmem [#allocation8], %s857
          %859 = dma.done %s855, 4096
        $region60: #{tpu_custom_call.1} parent=55 // pred_fallthru
          _
      $region56: #{tpu_custom_call.1} parent=5 // pred_fallthru
        _
    $region6: #{tpu_custom_call.1} parent=1 // loop_footer
      %s23 = sadd.s32 1, %s19
    $region7: #{tpu_custom_call.1} parent=1 // loop_footer_branch
      %18 = sbr.rel target = $region3
    $region8: #{tpu_custom_call.1} parent=1 // loop_exit
      _
    %860 = vsyncpa [#allocation4], 1
    %s861 = scalar_lea.sflag [#allocation4], 1
    %862 = vsyncpa %s861, 1
    %863 = vsyncpa [#allocation7], 1
    %864 = vsyncpa [#allocation5], 1
    %s865 = scalar_lea.sflag [#allocation5], 1
    %866 = vsyncpa %s865, 1

</llo_original>
